<compile_context>
chip_gen: v6e
topology: v6e:2x2x1
jax: 0.10.0
libtpu: 0.0.40
codegen_flags: <defaults>
</compile_context>

<pallas_src>
import jax
import jax.numpy as jnp
from jax import lax
from jax.experimental import pallas as pl
from jax.experimental.pallas import tpu as pltpu


def _round_up(x, m):
    return (x + m - 1) // m * m


def _make_kernel(resident_x, tile_k):
    contract_last = (((1,), (1,)), ((), ()))  # contract x[:, K] with W[:, K]

    def kernel(x_ref, worig_ref, bias_ref, wdown_ref, wup_ref, scale_ref,
               o_ref, acc_ref, down_ref):
        # x_ref     : [TILE_M, K_pad] (resident) or [TILE_M, TILE_K] (streamed)
        # worig_ref : [TILE_N, TILE_K]   original weight tile (torch [out, in])
        # bias_ref  : [1, TILE_N]        f32
        # wdown_ref : [CR, TILE_K]       all LoRA down weights (concat over compose)
        # wup_ref   : [CR, TILE_N]       all LoRA up weights   (concat over compose)
        # scale_ref : [TILE_M, CR]       f32, alpha * mixing weight per row/column
        # o_ref     : [TILE_M, TILE_N]
        # acc_ref   : VMEM f32 [TILE_M, TILE_N]  base-matmul accumulator over K
        # down_ref  : VMEM f32 [TILE_M, CR]      LoRA-down accumulator (persists over n)
        n = pl.program_id(1)
        k = pl.program_id(2)

        @pl.when(k == 0)
        def _():
            # Fold the bias into the accumulator init (removes an epilogue add).
            acc_ref[...] = jnp.broadcast_to(
                bias_ref[...], acc_ref.shape).astype(jnp.float32)

        @pl.when((k == 0) & (n == 0))
        def _():
            # Only reset the low-rank accumulator at the start of the n sweep;
            # it must persist for the n > 0 tiles of this m tile.
            down_ref[...] = jnp.zeros_like(down_ref)

        if resident_x:
            start = pl.multiple_of(k * tile_k, tile_k)
            x = x_ref[:, pl.ds(start, tile_k)]
        else:
            x = x_ref[...]

        # Base matmul: accumulate over K in f32.
        acc_ref[...] += lax.dot_general(x, worig_ref[...], contract_last,
                                        preferred_element_type=jnp.float32)

        # LoRA-down matmul only on the first N tile (hoisted out of the n loop).
        @pl.when(n == 0)
        def _():
            down_ref[...] += lax.dot_general(x, wdown_ref[...], contract_last,
                                             preferred_element_type=jnp.float32)

        @pl.when(k == pl.num_programs(2) - 1)
        def _():
            # Scale the low-rank intermediate (CR cols, not D_out), cast down to
            # W_up's native dtype (bf16 path stays on the fast MXU path).
            scaled = down_ref[...] * scale_ref[...].astype(jnp.float32)
            scaled = scaled.astype(wup_ref.dtype)
            lora = jnp.dot(scaled, wup_ref[...],
                           preferred_element_type=jnp.float32)   # [TILE_M, TILE_N]
            o_ref[...] = (acc_ref[...] + lora).astype(o_ref.dtype)

    return kernel


def multilora_linear_forward(x, weights, W_orig, b_orig, W_down, W_up, alpha=1.0,
                             tile_m=512, tile_n=256, tile_k=512,
                             compute_dtype=jnp.bfloat16):
    """x: [B, S, D_in], weights: [B, compose],
    W_orig: [D_out, D_in] (torch layout), b_orig: [D_out],
    W_down: [compose, rank, D_in], W_up: [compose, D_out, rank].

    Per-generation tuning hints (from the perf review):
      v5e : tile_m=256..512, tile_n=128..256, tile_k=512..1024
      v6e : tile_m=768..1024, tile_n=512, tile_k=1024 (raise vmem limit)
      v7x : tile_m=320..512 and keep >= 2 m tiles so both TensorCores are busy.
    """
    B, S, D_in = x.shape
    compose = weights.shape[1]
    D_out = W_orig.shape[0]
    rank = W_down.shape[1]
    CR = compose * rank
    CR_pad = _round_up(CR, 8)
    M = B * S

    # Tile sizes: lane-dense (last dims multiples of 128), clipped for tiny inputs.
    TILE_M = min(tile_m, _round_up(M, 8))
    TILE_N = min(tile_n, _round_up(D_out, 128))
    TILE_K = min(tile_k, _round_up(D_in, 128))
    M_pad = _round_up(M, TILE_M)
    N_pad = _round_up(D_out, TILE_N)
    K_pad = _round_up(D_in, TILE_K)

    cbytes = jnp.dtype(compute_dtype).itemsize
    obytes = jnp.dtype(x.dtype).itemsize

    def vmem_estimate(resident):
        x_blk = TILE_M * (K_pad if resident else TILE_K) * cbytes * 2
        w_blk = TILE_N * TILE_K * cbytes * 2
        wd_blk = CR_pad * TILE_K * cbytes * 2
        wu_blk = CR_pad * TILE_N * cbytes * 2
        b_blk = TILE_N * 4 * 2
        s_blk = TILE_M * CR_pad * 4 * 2
        o_blk = TILE_M * TILE_N * obytes * 2
        scratch = TILE_M * TILE_N * 4 + TILE_M * CR_pad * 4
        return x_blk + w_blk + wd_blk + wu_blk + b_blk + s_blk + o_blk + scratch

    # Keep the plan comfortably inside v7x's 64 MiB VMEM; fall back to K-tiled
    # x streaming only when full-K residency would not fit.
    VMEM_BUDGET = 32 << 20
    resident_x = vmem_estimate(True) <= VMEM_BUDGET
    vmem_bytes = vmem_estimate(resident_x)
    vmem_limit = int(min(max(32 << 20, int(1.5 * vmem_bytes)), 48 << 20))

    def pad2(a, rows, cols):
        pr, pc = rows - a.shape[0], cols - a.shape[1]
        return a if (pr == 0 and pc == 0) else jnp.pad(a, ((0, pr), (0, pc)))

    # Flatten (B, S) -> M rows; keep torch [out, in] layouts (no big HBM transpose).
    x2 = pad2(x.reshape(M, D_in), M_pad, K_pad).astype(compute_dtype)
    Wo = pad2(W_orig, N_pad, K_pad).astype(compute_dtype)                    # [N, K]
    bias = pad2(b_orig.reshape(1, D_out).astype(jnp.float32), 1, N_pad)      # [1, N] f32
    Wd = pad2(W_down.reshape(CR, D_in), CR_pad, K_pad).astype(compute_dtype)  # [CR, K]
    Wu = pad2(jnp.transpose(W_up, (0, 2, 1)).reshape(CR, D_out),
              CR_pad, N_pad).astype(compute_dtype)                            # [CR, N]

    # Per-row LoRA scale: alpha * weights[batch_of_row, branch], repeated over rank
    # (compose-major, rank-minor -> matches W_down/W_up reshape order).
    mix = (alpha * weights).astype(jnp.float32)                               # [B, compose]
    mix = jnp.repeat(mix, rank, axis=1)                                       # [B, CR]
    scale = jnp.broadcast_to(mix[:, None, :], (B, S, CR)).reshape(M, CR)
    scale = pad2(scale, M_pad, CR_pad)                                        # f32

    grid = (M_pad // TILE_M, N_pad // TILE_N, K_pad // TILE_K)
    m_tiles, n_tiles = grid[0], grid[1]

    if resident_x:
        x_spec = pl.BlockSpec((TILE_M, K_pad), lambda m, n, k: (m, 0))
        x_bytes = M_pad * K_pad * cbytes
    else:
        x_spec = pl.BlockSpec((TILE_M, TILE_K), lambda m, n, k: (m, k))
        x_bytes = n_tiles * M_pad * K_pad * cbytes

    cost = pl.CostEstimate(
        flops=2 * M * D_in * D_out + 2 * M * D_in * CR + 2 * M * CR * D_out,
        transcendentals=0,
        bytes_accessed=int(
            x_bytes
            + m_tiles * N_pad * K_pad * cbytes          # W_orig restreamed per m tile
            + m_tiles * CR_pad * K_pad * cbytes         # W_down restreamed per m tile
            + m_tiles * CR_pad * N_pad * cbytes         # W_up restreamed per m tile
            + 4 * (N_pad + M_pad * CR_pad)              # bias + scale (f32)
            + obytes * M_pad * N_pad),                  # output
    )

    out_p = pl.pallas_call(
        _make_kernel(resident_x, TILE_K),
        out_shape=jax.ShapeDtypeStruct((M_pad, N_pad), x.dtype),
        grid=grid,
        in_specs=[
            x_spec,                                                    # x rows
            pl.BlockSpec((TILE_N, TILE_K), lambda m, n, k: (n, k)),    # W_orig tile
            pl.BlockSpec((1, TILE_N), lambda m, n, k: (0, n)),         # bias
            pl.BlockSpec((CR_pad, TILE_K), lambda m, n, k: (0, k)),    # W_down (concat)
            pl.BlockSpec((CR_pad, TILE_N), lambda m, n, k: (0, n)),    # W_up (concat)
            pl.BlockSpec((TILE_M, CR_pad), lambda m, n, k: (m, 0)),    # per-row mix scale
        ],
        out_specs=pl.BlockSpec((TILE_M, TILE_N), lambda m, n, k: (m, n)),
        scratch_shapes=[pltpu.VMEM((TILE_M, TILE_N), jnp.float32),
                        pltpu.VMEM((TILE_M, CR_pad), jnp.float32)],
        compiler_params=pltpu.CompilerParams(
            # n must be sequential on one core (down_ref persists across n);
            # parallelism (incl. v7x's 2 TCs) comes from the m axis.
            dimension_semantics=("parallel", "arbitrary", "arbitrary"),
            vmem_limit_bytes=vmem_limit),
        cost_estimate=cost,
    )(x2, Wo, bias, Wd, Wu, scale)

    return out_p[:M, :D_out].reshape(B, S, D_out)


def multilora_linear_reference(x, weights, W_orig, b_orig, W_down, W_up, alpha=1.0):
    base = jnp.einsum('bsd,od->bso', x, W_orig) + b_orig
    down = jnp.einsum('bsd,crd->bcsr', x, W_down)
    up = jnp.einsum('bcsr,cor->bcso', down, W_up)
    lora = alpha * up
    mixed = jnp.sum(weights[:, :, None, None] * lora, axis=1)
    return base + mixed


def _make_inputs(key, B, S, D_in, D_out, rank, compose):
    kx, kw, kwo, kbo, kd, ku = jax.random.split(key, 6)
    x = jax.random.normal(kx, (B, S, D_in), dtype=jnp.float32)
    mix_weights = jax.random.uniform(kw, (B, compose), dtype=jnp.float32)
    W_orig = jax.random.normal(kwo, (D_out, D_in), dtype=jnp.float32) * 0.05
    b_orig = jax.random.normal(kbo, (D_out,), dtype=jnp.float32) * 0.05
    W_down = jax.random.normal(kd, (compose, rank, D_in), dtype=jnp.float32) * 0.05
    W_up = jax.random.normal(ku, (compose, D_out, rank), dtype=jnp.float32) * 0.05
    return x, mix_weights, W_orig, b_orig, W_down, W_up


if __name__ == "__main__":
    key = jax.random.PRNGKey(0)
    k1, k2 = jax.random.split(key)

    # Small shape matching the module defaults (rank=4); exact f32 compute path.
    B, S, D_in, D_out, rank, compose = 2, 8, 32, 32, 4, 2
    alpha = 1.0
    args = _make_inputs(k1, B, S, D_in, D_out, rank, compose)
    out = jax.block_until_ready(
        multilora_linear_forward(*args, alpha, compute_dtype=jnp.float32))
    ref = multilora_linear_reference(*args, alpha)
    assert out.shape == (B, S, D_out)
    assert jnp.allclose(out, ref, atol=1e-4, rtol=1e-4), "mismatch vs reference (small/f32)"

    # Larger shape that exercises the tiled (m, n, k) grid, the n==0-gated
    # LoRA-down accumulation, the resident full-K x slicing and the bf16 path.
    B, S, D_in, D_out, rank, compose = 2, 128, 256, 256, 8, 3
    args = _make_inputs(k2, B, S, D_in, D_out, rank, compose)
    out = jax.block_until_ready(
        multilora_linear_forward(*args, alpha, tile_m=128, tile_n=128, tile_k=128,
                                 compute_dtype=jnp.bfloat16))
    ref = multilora_linear_reference(*args, alpha)
    assert out.shape == (B, S, D_out)
    assert jnp.allclose(out, ref, atol=5e-2, rtol=5e-2), "mismatch vs reference (tiled/bf16)"

    # TODO(synk): Conv2d (1x1) branch of the module is not implemented; it is
    # mathematically the same per-pixel linear map and could reuse this kernel
    # after an NCHW -> [B, H*W, C] reshape.
    print("KERNEL_OK")
</pallas_src>

<mosaic_0001>
module attributes {stable_mosaic.version = 11 : i64} {
  func.func @kernel(%arg0: i32, %arg1: i32, %arg2: i32, %arg3: memref<16x128xf32, #tpu.memory_space<vmem>>, %arg4: memref<128x128xf32, #tpu.memory_space<vmem>>, %arg5: memref<1x128xf32, #tpu.memory_space<vmem>>, %arg6: memref<8x128xf32, #tpu.memory_space<vmem>>, %arg7: memref<8x128xf32, #tpu.memory_space<vmem>>, %arg8: memref<16x8xf32, #tpu.memory_space<vmem>>, %arg9: memref<16x128xf32, #tpu.memory_space<vmem>>, %arg10: memref<16x128xf32, #tpu.memory_space<vmem>>, %arg11: memref<16x8xf32, #tpu.memory_space<vmem>>) attributes {dimension_semantics = [#tpu.dimension_semantics<parallel>, #tpu.dimension_semantics<arbitrary>, #tpu.dimension_semantics<arbitrary>], iteration_bounds = array<i64: 1, 1, 1>, scalar_prefetch = 0 : i64, scratch_operands = 2 : i64, tpu.core_type = #tpu.core_type<tc>, window_params = [{transform_indices = @transform_0, window_bounds = array<i64: 16, 128>}, {transform_indices = @transform_1, window_bounds = array<i64: 128, 128>}, {transform_indices = @transform_2, window_bounds = array<i64: 1, 128>}, {transform_indices = @transform_3, window_bounds = array<i64: 8, 128>}, {transform_indices = @transform_4, window_bounds = array<i64: 8, 128>}, {transform_indices = @transform_5, window_bounds = array<i64: 16, 8>}, {transform_indices = @transform_6, window_bounds = array<i64: 16, 128>}]} {
    %c0_i32 = arith.constant 0 : i32
    %0 = arith.cmpi eq, %arg2, %c0_i32 : i32
    %1 = arith.extui %0 : i1 to i32
    %c0_i32_0 = arith.constant 0 : i32
    %2 = arith.cmpi ne, %1, %c0_i32_0 : i32
    scf.if %2 {
      %c0_14 = arith.constant 0 : index
      %c0_15 = arith.constant 0 : index
      %23 = vector.load %arg5[%c0_14, %c0_15] : memref<1x128xf32, #tpu.memory_space<vmem>>, vector<1x128xf32>
      %24 = vector.shape_cast %23 : vector<1x128xf32> to vector<1x128xf32>
      %25 = vector.broadcast %24 : vector<1x128xf32> to vector<16x128xf32>
      %c0_16 = arith.constant 0 : index
      %c0_17 = arith.constant 0 : index
      %26 = vector.load %arg10[%c0_16, %c0_17] : memref<16x128xf32, #tpu.memory_space<vmem>>, vector<16x128xf32>
      tpu.vector_store %arg10[%c0_16, %c0_17], %25 {strides = array<i32>} : memref<16x128xf32, #tpu.memory_space<vmem>>, vector<16x128xf32>,
    } else {
    }
    %c0_i32_1 = arith.constant 0 : i32
    %3 = arith.cmpi eq, %arg2, %c0_i32_1 : i32
    %c0_i32_2 = arith.constant 0 : i32
    %4 = arith.cmpi eq, %arg1, %c0_i32_2 : i32
    %5 = arith.andi %3, %4 : i1
    %6 = arith.extui %5 : i1 to i32
    %c0_i32_3 = arith.constant 0 : i32
    %7 = arith.cmpi ne, %6, %c0_i32_3 : i32
    scf.if %7 {
      %cst_14 = arith.constant 0.000000e+00 : f32
      %23 = vector.broadcast %cst_14 : f32 to vector<16x8xf32>
      %c0_15 = arith.constant 0 : index
      %c0_16 = arith.constant 0 : index
      %24 = vector.load %arg11[%c0_15, %c0_16] : memref<16x8xf32, #tpu.memory_space<vmem>>, vector<16x8xf32>
      tpu.vector_store %arg11[%c0_15, %c0_16], %23 {strides = array<i32>} : memref<16x8xf32, #tpu.memory_space<vmem>>, vector<16x8xf32>,
    } else {
    }
    %c128_i32 = arith.constant 128 : i32
    %8 = arith.muli %arg2, %c128_i32 : i32
    %9 = tpu.assume_multiple %8, 128 : i32
    %c0 = arith.constant 0 : index
    %10 = arith.index_cast %9 : i32 to index
    %11 = vector.load %arg3[%c0, %10] : memref<16x128xf32, #tpu.memory_space<vmem>>, vector<16x128xf32>
    %c0_4 = arith.constant 0 : index
    %c0_5 = arith.constant 0 : index
    %12 = vector.load %arg10[%c0_4, %c0_5] : memref<16x128xf32, #tpu.memory_space<vmem>>, vector<16x128xf32>
    %c0_6 = arith.constant 0 : index
    %c0_7 = arith.constant 0 : index
    %13 = vector.load %arg4[%c0_6, %c0_7] : memref<128x128xf32, #tpu.memory_space<vmem>>, vector<128x128xf32>
    %cst = arith.constant dense<0.000000e+00> : vector<16x128xf32>
    %14 = tpu.matmul %11, %13, %cst {dimension_numbers = #tpu.dot_dimension_numbers<[1], [1], [0], [0], [0, 0, 1, 0], [], []>} : vector<16x128xf32>, vector<128x128xf32>, vector<16x128xf32> -> vector<16x128xf32>
    %15 = arith.addf %12, %14 : vector<16x128xf32>
    %c0_8 = arith.constant 0 : index
    %c0_9 = arith.constant 0 : index
    %16 = vector.load %arg10[%c0_8, %c0_9] : memref<16x128xf32, #tpu.memory_space<vmem>>, vector<16x128xf32>
    tpu.vector_store %arg10[%c0_8, %c0_9], %15 {strides = array<i32>} : memref<16x128xf32, #tpu.memory_space<vmem>>, vector<16x128xf32>,
    %c0_i32_10 = arith.constant 0 : i32
    %17 = arith.cmpi eq, %arg1, %c0_i32_10 : i32
    %18 = arith.extui %17 : i1 to i32
    %c0_i32_11 = arith.constant 0 : i32
    %19 = arith.cmpi ne, %18, %c0_i32_11 : i32
    scf.if %19 {
      %c0_14 = arith.constant 0 : index
      %c0_15 = arith.constant 0 : index
      %23 = vector.load %arg11[%c0_14, %c0_15] : memref<16x8xf32, #tpu.memory_space<vmem>>, vector<16x8xf32>
      %c0_16 = arith.constant 0 : index
      %c0_17 = arith.constant 0 : index
      %24 = vector.load %arg6[%c0_16, %c0_17] : memref<8x128xf32, #tpu.memory_space<vmem>>, vector<8x128xf32>
      %cst_18 = arith.constant dense<0.000000e+00> : vector<16x8xf32>
      %25 = tpu.matmul %11, %24, %cst_18 {dimension_numbers = #tpu.dot_dimension_numbers<[1], [1], [0], [0], [0, 0, 1, 0], [], []>} : vector<16x128xf32>, vector<8x128xf32>, vector<16x8xf32> -> vector<16x8xf32>
      %26 = arith.addf %23, %25 : vector<16x8xf32>
      %c0_19 = arith.constant 0 : index
      %c0_20 = arith.constant 0 : index
      %27 = vector.load %arg11[%c0_19, %c0_20] : memref<16x8xf32, #tpu.memory_space<vmem>>, vector<16x8xf32>
      tpu.vector_store %arg11[%c0_19, %c0_20], %26 {strides = array<i32>} : memref<16x8xf32, #tpu.memory_space<vmem>>, vector<16x8xf32>,
    } else {
    }
    %c0_i32_12 = arith.constant 0 : i32
    %20 = arith.cmpi eq, %arg2, %c0_i32_12 : i32
    %21 = arith.extui %20 : i1 to i32
    %c0_i32_13 = arith.constant 0 : i32
    %22 = arith.cmpi ne, %21, %c0_i32_13 : i32
    scf.if %22 {
      %c0_14 = arith.constant 0 : index
      %c0_15 = arith.constant 0 : index
      %23 = vector.load %arg11[%c0_14, %c0_15] : memref<16x8xf32, #tpu.memory_space<vmem>>, vector<16x8xf32>
      %c0_16 = arith.constant 0 : index
      %c0_17 = arith.constant 0 : index
      %24 = vector.load %arg8[%c0_16, %c0_17] : memref<16x8xf32, #tpu.memory_space<vmem>>, vector<16x8xf32>
      %25 = arith.mulf %23, %24 : vector<16x8xf32>
      %c0_18 = arith.constant 0 : index
      %c0_19 = arith.constant 0 : index
      %26 = vector.load %arg7[%c0_18, %c0_19] : memref<8x128xf32, #tpu.memory_space<vmem>>, vector<8x128xf32>
      %cst_20 = arith.constant dense<0.000000e+00> : vector<16x128xf32>
      %27 = tpu.matmul %25, %26, %cst_20 {dimension_numbers = #tpu.dot_dimension_numbers<[1], [0], [0], [1], [0, 0, 1, 1], [], []>} : vector<16x8xf32>, vector<8x128xf32>, vector<16x128xf32> -> vector<16x128xf32>
      %c0_21 = arith.constant 0 : index
      %c0_22 = arith.constant 0 : index
      %28 = vector.load %arg10[%c0_21, %c0_22] : memref<16x128xf32, #tpu.memory_space<vmem>>, vector<16x128xf32>
      %29 = arith.addf %28, %27 : vector<16x128xf32>
      %c0_23 = arith.constant 0 : index
      %c0_24 = arith.constant 0 : index
      %30 = vector.load %arg9[%c0_23, %c0_24] : memref<16x128xf32, #tpu.memory_space<vmem>>, vector<16x128xf32>
      tpu.vector_store %arg9[%c0_23, %c0_24], %29 {strides = array<i32>} : memref<16x128xf32, #tpu.memory_space<vmem>>, vector<16x128xf32>,
    } else {
    }
    return
  }
  func.func @transform_0(%arg0: i32, %arg1: i32, %arg2: i32) -> (i32, i32) {
    %c0_i32 = arith.constant 0 : i32
    %c0_i32_0 = arith.constant 0 : i32
    return %arg0, %c0_i32 : i32, i32
  }
  func.func @transform_1(%arg0: i32, %arg1: i32, %arg2: i32) -> (i32, i32) {
    %c0_i32 = arith.constant 0 : i32
    return %arg1, %arg2 : i32, i32
  }
  func.func @transform_2(%arg0: i32, %arg1: i32, %arg2: i32) -> (i32, i32) {
    %c0_i32 = arith.constant 0 : i32
    %c0_i32_0 = arith.constant 0 : i32
    return %c0_i32, %arg1 : i32, i32
  }
  func.func @transform_3(%arg0: i32, %arg1: i32, %arg2: i32) -> (i32, i32) {
    %c0_i32 = arith.constant 0 : i32
    %c0_i32_0 = arith.constant 0 : i32
    return %c0_i32, %arg2 : i32, i32
  }
  func.func @transform_4(%arg0: i32, %arg1: i32, %arg2: i32) -> (i32, i32) {
    %c0_i32 = arith.constant 0 : i32
    %c0_i32_0 = arith.constant 0 : i32
    return %c0_i32, %arg1 : i32, i32
  }
  func.func @transform_5(%arg0: i32, %arg1: i32, %arg2: i32) -> (i32, i32) {
    %c0_i32 = arith.constant 0 : i32
    %c0_i32_0 = arith.constant 0 : i32
    return %arg0, %c0_i32 : i32, i32
  }
  func.func @transform_6(%arg0: i32, %arg1: i32, %arg2: i32) -> (i32, i32) {
    %c0_i32 = arith.constant 0 : i32
    return %arg0, %arg1 : i32, i32
  }
}

</mosaic_0001>

<llo_original>
// kernel: tpu_custom_call.1
$region0: #{tpu_custom_call.1}
  #allocation0 [shape = 'u32[]', space=smem, size = 0x4, offset = 0x4, fixed_abs, tag = 'smem constant byte address 0x4 - core index']
  #allocation1 [shape = 'u32[144,128]{1,0:T(1,128)}', space=vmem, size = 0x12000, scoped, tag = 'internal scratch']
  #allocation2 [shape = 'f32[16,128]{1,0:T(8,128)}', space=vmem, size = 0x2000, scoped, tag = 'scratch operand']
  #allocation3 [shape = 'f32[16,8]{1,0:T(8,128)}', space=vmem, size = 0x2000, scoped, tag = 'scratch operand']
  %s0 = inlined_call_operand.vmem [shape: f32[16,128], index: 0, kind: input, shape index: {}]
  %s1 = inlined_call_operand.hbm [shape: f32[128,128], index: 1, kind: input, shape index: {}]
  %s2 = inlined_call_operand.vmem [shape: f32[1,128], index: 2, kind: input, shape index: {}]
  %s3 = inlined_call_operand.vmem [shape: f32[8,128], index: 3, kind: input, shape index: {}]
  %s4 = inlined_call_operand.hbm [shape: f32[8,128], index: 4, kind: input, shape index: {}]
  %s5 = inlined_call_operand.vmem [shape: f32[16,8], index: 5, kind: input, shape index: {}]
  %s6 = inlined_call_operand.hbm [shape: f32[16,128], index: 6, kind: output, shape index: {}]
  %s7 = sld [smem:[#allocation0]]
  $region58: #{tpu_custom_call.1} parent=0
    _
  %s9 = ssub.s32 1, %s7
  %s10 = scalar_select 0, %s9, %s7
  $region1: #{tpu_custom_call.1} parent=0
    #allocation4 [shape = 'u8[65536]{0}', space=vmem, size = 0x10000, scoped, tag = 'input window, operand 1, single buffered']
    #allocation5 [shape = 's32[1]{0}', space=sflag, size = 0x4, scoped, tag = 'scoped memory for tpu_custom_call.1']
    #allocation6 [shape = 's32[1]{0}', space=sflag, size = 0x4, scoped, tag = 'scoped memory for tpu_custom_call.1']
    #allocation7 [shape = 'u8[4096]{0}', space=vmem, size = 0x1000, scoped, tag = 'input window, operand 4, single buffered']
    #allocation8 [shape = 's32[1]{0}', space=sflag, size = 0x4, scoped, tag = 'scoped memory for tpu_custom_call.1']
    #allocation9 [shape = 'u8[8192]{0}', space=vmem, size = 0x2000, scoped, tag = 'output window, operand 0, single buffered']
    %11 = vsyncpa [#allocation5], 0
    %12 = vsyncpa [#allocation8], 0
    %13 = vsyncpa [#allocation6], 0
    // Predicated region
    $region2: #{tpu_custom_call.1} parent=1 // pred_check
      _
    $region3: #{tpu_custom_call.1} parent=1 // pred_check_branch
      %15 = sbr.rel (0) target = $region5
    $region4: #{tpu_custom_call.1} parent=1 // pred_region
      _
    $region5: #{tpu_custom_call.1} parent=1 // pred_fallthru
      _
    // Predicated region
    $region6: #{tpu_custom_call.1} parent=1 // pred_check
      _
    $region7: #{tpu_custom_call.1} parent=1 // pred_check_branch
      %17 = sbr.rel (0) target = $region9
    $region8: #{tpu_custom_call.1} parent=1 // pred_region
      %s19 = ssub.s32 2048, 2048
      %20 = vsyncadd [#allocation5], %s19
      %s21 = sshll.u32 [#allocation4], 4
      %s22 = int_to_ptr.vmem [resolvable:$true] %s21
      %27 = dma.hbm_to_vmem [thread:$0]  %s1, 2048, %s22, [#allocation5], 128, 128, 8
    $region9: #{tpu_custom_call.1} parent=1 // pred_fallthru
      _
    // Predicated region
    $region10: #{tpu_custom_call.1} parent=1 // pred_check
      _
    $region11: #{tpu_custom_call.1} parent=1 // pred_check_branch
      %29 = sbr.rel (0) target = $region13
    $region12: #{tpu_custom_call.1} parent=1 // pred_region
      _
    $region13: #{tpu_custom_call.1} parent=1 // pred_fallthru
      _
    // Predicated region
    $region14: #{tpu_custom_call.1} parent=1 // pred_check
      _
    $region15: #{tpu_custom_call.1} parent=1 // pred_check_branch
      %31 = sbr.rel (0) target = $region17
    $region16: #{tpu_custom_call.1} parent=1 // pred_region
      _
    $region17: #{tpu_custom_call.1} parent=1 // pred_fallthru
      _
    // Predicated region
    $region18: #{tpu_custom_call.1} parent=1 // pred_check
      _
    $region19: #{tpu_custom_call.1} parent=1 // pred_check_branch
      %33 = sbr.rel (0) target = $region21
    $region20: #{tpu_custom_call.1} parent=1 // pred_region
      %s35 = ssub.s32 128, 128
      %36 = vsyncadd [#allocation8], %s35
      %s38 = sshll.u32 [#allocation7], 4
      %s39 = int_to_ptr.vmem [resolvable:$true] %s38
      %41 = dma.hbm_to_vmem [thread:$0]  %s4, 128, %s39, [#allocation8]
    $region21: #{tpu_custom_call.1} parent=1 // pred_fallthru
      _
    // Predicated region
    $region22: #{tpu_custom_call.1} parent=1 // pred_check
      _
    $region23: #{tpu_custom_call.1} parent=1 // pred_check_branch
      %43 = sbr.rel (0) target = $region25
    $region24: #{tpu_custom_call.1} parent=1 // pred_region
      _
    $region25: #{tpu_custom_call.1} parent=1 // pred_fallthru
      _
    // Predicated region
    $region26: #{tpu_custom_call.1} parent=1 // pred_check
      _
    $region27: #{tpu_custom_call.1} parent=1 // pred_check_branch
      %45 = sbr.rel (0) target = $region29
    $region28: #{tpu_custom_call.1} parent=1 // pred_region
      %46 = dma.done [#allocation5], 2048
    $region29: #{tpu_custom_call.1} parent=1 // pred_fallthru
      _
    // Predicated region
    $region30: #{tpu_custom_call.1} parent=1 // pred_check
      _
    $region31: #{tpu_custom_call.1} parent=1 // pred_check_branch
      %48 = sbr.rel (0) target = $region33
    $region32: #{tpu_custom_call.1} parent=1 // pred_region
      %49 = dma.done [#allocation8], 128
    $region33: #{tpu_custom_call.1} parent=1 // pred_fallthru
      _
    %p50 = scmp.eq.s32.totalorder 0, 0
    // Predicated region
    $region34: #{tpu_custom_call.1} parent=1 // pred_check
      %p51 = pneg %p50
    $region35: #{tpu_custom_call.1} parent=1 // pred_check_branch
      %53 = sbr.rel (%p51) target = $region37
    $region36: #{tpu_custom_call.1} parent=1 // pred_region
      %v54 = vld [vmem:[%s2] sm:$0x1]
      %v56 = vlaneseq
      %v57 = vshrl.u32 %v56, 7
      %v58 = vsub.s32 0, %v57
      %v59 = vrot.slane %v54, %v58
      %61 = vst [vmem:[#allocation2] sm:$0xff] %v59
      %62 = vst [vmem:[#allocation2 + $0x8] sm:$0xff] %v59
    $region37: #{tpu_custom_call.1} parent=1 // pred_fallthru
      _
    %p63 = scmp.eq.s32.totalorder 0, 0
    %p64 = pnand %p50, %p63
    %p65 = pneg %p64
    // Predicated region
    $region38: #{tpu_custom_call.1} parent=1 // pred_check
      _
    $region39: #{tpu_custom_call.1} parent=1 // pred_check_branch
      %67 = sbr.rel (%p64) target = $region41
    $region40: #{tpu_custom_call.1} parent=1 // pred_region
      %vm68 = vcmask 64512
      %69 = vst.msk [vmem:[#allocation3] sm:$0xff] %vm68, 0.0
      %70 = vst.msk [vmem:[#allocation3 + $0x8] sm:$0xff] %vm68, 0.0
    $region41: #{tpu_custom_call.1} parent=1 // pred_fallthru
      _
    %s71 = smul.u32 0, 128
    %s72 = sshra.s32 %s71, 7
    %s73 = sand.u32 %s71, 127
    %s74 = scalar_lea.vmem %s0, %s72
    %v75 = vld [vmem:[%s74] sm:$0xff]
    %v76 = vld [vmem:[%s74 + $0x8] sm:$0xff]
    %v77 = vld [vmem:[#allocation2] sm:$0xff]
    %v78 = vld [vmem:[#allocation2 + $0x8] sm:$0xff]
    %v79 = vld [vmem:[#allocation4] sm:$0xff]
    %v80 = vld [vmem:[#allocation4 + $0x8] sm:$0xff]
    %v81 = vld [vmem:[#allocation4 + $0x10] sm:$0xff]
    %v82 = vld [vmem:[#allocation4 + $0x18] sm:$0xff]
    %v83 = vld [vmem:[#allocation4 + $0x20] sm:$0xff]
    %v84 = vld [vmem:[#allocation4 + $0x28] sm:$0xff]
    %v85 = vld [vmem:[#allocation4 + $0x30] sm:$0xff]
    %v86 = vld [vmem:[#allocation4 + $0x38] sm:$0xff]
    %v87 = vld [vmem:[#allocation4 + $0x40] sm:$0xff]
    %v88 = vld [vmem:[#allocation4 + $0x48] sm:$0xff]
    %v89 = vld [vmem:[#allocation4 + $0x50] sm:$0xff]
    %v90 = vld [vmem:[#allocation4 + $0x58] sm:$0xff]
    %v91 = vld [vmem:[#allocation4 + $0x60] sm:$0xff]
    %v92 = vld [vmem:[#allocation4 + $0x68] sm:$0xff]
    %v93 = vld [vmem:[#allocation4 + $0x70] sm:$0xff]
    %v94 = vld [vmem:[#allocation4 + $0x78] sm:$0xff]
    %95 = vmatprep.subr.mxu0 0.0
    %96 = vmatpush1.xpose.msra.mxu0 %v94
    %97 = vmatprep.subr.mxu0 0.0
    %98 = vmatpush1.xpose.msra.mxu0 %v93
    %99 = vmatprep.subr.mxu0 0.0
    %100 = vmatpush1.xpose.msra.mxu0 %v92
    %101 = vmatprep.subr.mxu0 0.0
    %102 = vmatpush1.xpose.msra.mxu0 %v91
    %103 = vmatprep.subr.mxu0 0.0
    %104 = vmatpush1.xpose.msra.mxu0 %v90
    %105 = vmatprep.subr.mxu0 0.0
    %106 = vmatpush1.xpose.msra.mxu0 %v89
    %107 = vmatprep.subr.mxu0 0.0
    %108 = vmatpush1.xpose.msra.mxu0 %v88
    %109 = vmatprep.subr.mxu0 0.0
    %110 = vmatpush1.xpose.msra.mxu0 %v87
    %111 = vmatprep.subr.mxu0 0.0
    %112 = vmatpush1.xpose.msra.mxu0 %v86
    %113 = vmatprep.subr.mxu0 0.0
    %114 = vmatpush1.xpose.msra.mxu0 %v85
    %115 = vmatprep.subr.mxu0 0.0
    %116 = vmatpush1.xpose.msra.mxu0 %v84
    %117 = vmatprep.subr.mxu0 0.0
    %118 = vmatpush1.xpose.msra.mxu0 %v83
    %119 = vmatprep.subr.mxu0 0.0
    %120 = vmatpush1.xpose.msra.mxu0 %v82
    %121 = vmatprep.subr.mxu0 0.0
    %122 = vmatpush1.xpose.msra.mxu0 %v81
    %123 = vmatprep.subr.mxu0 0.0
    %124 = vmatpush1.xpose.msra.mxu0 %v80
    %125 = vmatprep.subr.mxu0 0.0
    %126 = vmatpush1.xpose.msra.mxu0 %v79
    %127 = vmatprep.subr.mxu0 0.0
    %128 = vmatpush2.xpose.msra.mxu0 0.0
    %129 = vmatprep.subr.mxu0 0.0
    %130 = vmatpush2.xpose.msra.mxu0 0.0
    %131 = vmatprep.subr.mxu0 0.0
    %132 = vmatpush2.xpose.msra.mxu0 0.0
    %133 = vmatprep.subr.mxu0 0.0
    %134 = vmatpush2.xpose.msra.mxu0 0.0
    %135 = vmatprep.subr.mxu0 0.0
    %136 = vmatpush2.xpose.msra.mxu0 0.0
    %137 = vmatprep.subr.mxu0 0.0
    %138 = vmatpush2.xpose.msra.mxu0 0.0
    %139 = vmatprep.subr.mxu0 0.0
    %140 = vmatpush2.xpose.msra.mxu0 0.0
    %141 = vmatprep.subr.mxu0 0.0
    %142 = vmatpush2.xpose.msra.mxu0 0.0
    %143 = vmatprep.subr.mxu0 0.0
    %144 = vmatpush2.xpose.msra.mxu0 0.0
    %145 = vmatprep.subr.mxu0 0.0
    %146 = vmatpush2.xpose.msra.mxu0 0.0
    %147 = vmatprep.subr.mxu0 0.0
    %148 = vmatpush2.xpose.msra.mxu0 0.0
    %149 = vmatprep.subr.mxu0 0.0
    %150 = vmatpush2.xpose.msra.mxu0 0.0
    %151 = vmatprep.subr.mxu0 0.0
    %152 = vmatpush2.xpose.msra.mxu0 0.0
    %153 = vmatprep.subr.mxu0 0.0
    %154 = vmatpush2.xpose.msra.mxu0 0.0
    %155 = vmatprep.subr.mxu0 0.0
    %156 = vmatpush2.xpose.msra.mxu0 0.0
    %157 = vmatprep.subr.mxu0 0.0
    %158 = vmatpush2.xpose.msra.mxu0 0.0
    %159 = vmatprep.mubr.f32.mxu0 0.0
    %160 = vmatmul.mubr.f32.gmra.mxu0 %v75
    %v161 = vpop.f32.mrf.mxu0
    %v162 = vadd.f32 0.0, %v161
    %v163 = vpop.f32.mrf.mxu0
    %164 = vmatprep.mubr.f32.mxu0 0.0
    %165 = vmatmul.mubr.f32.gmra.mxu0 %v76
    %v166 = vpop.f32.mrf.mxu0
    %v167 = vadd.f32 0.0, %v166
    %v168 = vpop.f32.mrf.mxu0
    %169 = vdwg.mxu0
    %v170 = vadd.f32 %v77, %v162
    %v171 = vadd.f32 %v78, %v167
    %172 = vst [vmem:[#allocation2] sm:$0xff] %v170
    %173 = vst [vmem:[#allocation2 + $0x8] sm:$0xff] %v171
    // Predicated region
    $region42: #{tpu_custom_call.1} parent=1 // pred_check
      %p174 = pneg %p63
    $region43: #{tpu_custom_call.1} parent=1 // pred_check_branch
      %176 = sbr.rel (%p174) target = $region45
    $region44: #{tpu_custom_call.1} parent=1 // pred_region
      %v177 = vld [vmem:[#allocation3] sm:$0xff]
      %v178 = vld [vmem:[#allocation3 + $0x8] sm:$0xff]
      %v179 = vld [vmem:[%s3] sm:$0xff]
      %180 = vmatprep.subr.mxu0 0.0
      %181 = vmatpush1.xpose.msra.mxu0 0.0
      %182 = vmatprep.subr.mxu0 0.0
      %183 = vmatpush1.xpose.msra.mxu0 0.0
      %184 = vmatprep.subr.mxu0 0.0
      %185 = vmatpush1.xpose.msra.mxu0 0.0
      %186 = vmatprep.subr.mxu0 0.0
      %187 = vmatpush1.xpose.msra.mxu0 0.0
      %188 = vmatprep.subr.mxu0 0.0
      %189 = vmatpush1.xpose.msra.mxu0 0.0
      %190 = vmatprep.subr.mxu0 0.0
      %191 = vmatpush1.xpose.msra.mxu0 0.0
      %192 = vmatprep.subr.mxu0 0.0
      %193 = vmatpush1.xpose.msra.mxu0 0.0
      %194 = vmatprep.subr.mxu0 0.0
      %195 = vmatpush1.xpose.msra.mxu0 0.0
      %196 = vmatprep.subr.mxu0 0.0
      %197 = vmatpush1.xpose.msra.mxu0 0.0
      %198 = vmatprep.subr.mxu0 0.0
      %199 = vmatpush1.xpose.msra.mxu0 0.0
      %200 = vmatprep.subr.mxu0 0.0
      %201 = vmatpush1.xpose.msra.mxu0 0.0
      %202 = vmatprep.subr.mxu0 0.0
      %203 = vmatpush1.xpose.msra.mxu0 0.0
      %204 = vmatprep.subr.mxu0 0.0
      %205 = vmatpush1.xpose.msra.mxu0 0.0
      %206 = vmatprep.subr.mxu0 0.0
      %207 = vmatpush1.xpose.msra.mxu0 0.0
      %208 = vmatprep.subr.mxu0 0.0
      %209 = vmatpush1.xpose.msra.mxu0 0.0
      %210 = vmatprep.subr.mxu0 0.0
      %211 = vmatpush1.xpose.msra.mxu0 %v179
      %212 = vmatprep.subr.mxu0 0.0
      %213 = vmatpush2.xpose.msra.mxu0 0.0
      %214 = vmatprep.subr.mxu0 0.0
      %215 = vmatpush2.xpose.msra.mxu0 0.0
      %216 = vmatprep.subr.mxu0 0.0
      %217 = vmatpush2.xpose.msra.mxu0 0.0
      %218 = vmatprep.subr.mxu0 0.0
      %219 = vmatpush2.xpose.msra.mxu0 0.0
      %220 = vmatprep.subr.mxu0 0.0
      %221 = vmatpush2.xpose.msra.mxu0 0.0
      %222 = vmatprep.subr.mxu0 0.0
      %223 = vmatpush2.xpose.msra.mxu0 0.0
      %224 = vmatprep.subr.mxu0 0.0
      %225 = vmatpush2.xpose.msra.mxu0 0.0
      %226 = vmatprep.subr.mxu0 0.0
      %227 = vmatpush2.xpose.msra.mxu0 0.0
      %228 = vmatprep.subr.mxu0 0.0
      %229 = vmatpush2.xpose.msra.mxu0 0.0
      %230 = vmatprep.subr.mxu0 0.0
      %231 = vmatpush2.xpose.msra.mxu0 0.0
      %232 = vmatprep.subr.mxu0 0.0
      %233 = vmatpush2.xpose.msra.mxu0 0.0
      %234 = vmatprep.subr.mxu0 0.0
      %235 = vmatpush2.xpose.msra.mxu0 0.0
      %236 = vmatprep.subr.mxu0 0.0
      %237 = vmatpush2.xpose.msra.mxu0 0.0
      %238 = vmatprep.subr.mxu0 0.0
      %239 = vmatpush2.xpose.msra.mxu0 0.0
      %240 = vmatprep.subr.mxu0 0.0
      %241 = vmatpush2.xpose.msra.mxu0 0.0
      %242 = vmatprep.subr.mxu0 0.0
      %243 = vmatpush2.xpose.msra.mxu0 0.0
      %244 = vmatprep.mubr.f32.mxu0 0.0
      %245 = vmatmul.mubr.f32.gmra.mxu0 %v75
      %v246 = vpop.f32.mrf.mxu0
      %v247 = vadd.f32 0.0, %v246
      %v248 = vpop.f32.mrf.mxu0
      %249 = vmatprep.mubr.f32.mxu0 0.0
      %250 = vmatmul.mubr.f32.gmra.mxu0 %v76
      %v251 = vpop.f32.mrf.mxu0
      %v252 = vadd.f32 0.0, %v251
      %v253 = vpop.f32.mrf.mxu0
      %254 = vdwg.mxu0
      %v255 = vadd.f32 %v177, %v247
      %v256 = vadd.f32 %v178, %v252
      %vm257 = vcmask 64512
      %258 = vst.msk [vmem:[#allocation3] sm:$0xff] %vm257, %v255
      %259 = vst.msk [vmem:[#allocation3 + $0x8] sm:$0xff] %vm257, %v256
    $region45: #{tpu_custom_call.1} parent=1 // pred_fallthru
      _
    // Predicated region
    $region46: #{tpu_custom_call.1} parent=1 // pred_check
      %p260 = pneg %p50
    $region47: #{tpu_custom_call.1} parent=1 // pred_check_branch
      %262 = sbr.rel (%p260) target = $region49
    $region48: #{tpu_custom_call.1} parent=1 // pred_region
      %v263 = vld [vmem:[#allocation3] sm:$0xff]
      %v264 = vld [vmem:[#allocation3 + $0x8] sm:$0xff]
      %v265 = vld [vmem:[%s5] sm:$0xff]
      %v266 = vld [vmem:[%s5 + $0x8] sm:$0xff]
      %v267 = vmul.f32 %v263, %v265
      %v268 = vmul.f32 %v264, %v266
      %v269 = vld [vmem:[#allocation7] sm:$0xff]
      %vm270 = vcmask 64512
      %v272 = vsel %vm270, %v267, 0
      %v275 = vsel %vm270, %v268, 0
      %277 = vmatprep.subr.mxu0 0.0
      %278 = vmatpush1.msra.mxu0 0.0
      %279 = vmatprep.subr.mxu0 0.0
      %280 = vmatpush1.msra.mxu0 0.0
      %281 = vmatprep.subr.mxu0 0.0
      %282 = vmatpush1.msra.mxu0 0.0
      %283 = vmatprep.subr.mxu0 0.0
      %284 = vmatpush1.msra.mxu0 0.0
      %285 = vmatprep.subr.mxu0 0.0
      %286 = vmatpush1.msra.mxu0 0.0
      %287 = vmatprep.subr.mxu0 0.0
      %288 = vmatpush1.msra.mxu0 0.0
      %289 = vmatprep.subr.mxu0 0.0
      %290 = vmatpush1.msra.mxu0 0.0
      %291 = vmatprep.subr.mxu0 0.0
      %292 = vmatpush1.msra.mxu0 0.0
      %293 = vmatprep.subr.mxu0 0.0
      %294 = vmatpush1.msra.mxu0 0.0
      %295 = vmatprep.subr.mxu0 0.0
      %296 = vmatpush1.msra.mxu0 0.0
      %297 = vmatprep.subr.mxu0 0.0
      %298 = vmatpush1.msra.mxu0 0.0
      %299 = vmatprep.subr.mxu0 0.0
      %300 = vmatpush1.msra.mxu0 0.0
      %301 = vmatprep.subr.mxu0 0.0
      %302 = vmatpush1.msra.mxu0 0.0
      %303 = vmatprep.subr.mxu0 0.0
      %304 = vmatpush1.msra.mxu0 0.0
      %305 = vmatprep.subr.mxu0 0.0
      %306 = vmatpush1.msra.mxu0 0.0
      %307 = vmatprep.subr.mxu0 0.0
      %308 = vmatpush1.msra.mxu0 %v269
      %309 = vmatprep.subr.mxu0 0.0
      %310 = vmatpush2.msra.mxu0 0.0
      %311 = vmatprep.subr.mxu0 0.0
      %312 = vmatpush2.msra.mxu0 0.0
      %313 = vmatprep.subr.mxu0 0.0
      %314 = vmatpush2.msra.mxu0 0.0
      %315 = vmatprep.subr.mxu0 0.0
      %316 = vmatpush2.msra.mxu0 0.0
      %317 = vmatprep.subr.mxu0 0.0
      %318 = vmatpush2.msra.mxu0 0.0
      %319 = vmatprep.subr.mxu0 0.0
      %320 = vmatpush2.msra.mxu0 0.0
      %321 = vmatprep.subr.mxu0 0.0
      %322 = vmatpush2.msra.mxu0 0.0
      %323 = vmatprep.subr.mxu0 0.0
      %324 = vmatpush2.msra.mxu0 0.0
      %325 = vmatprep.subr.mxu0 0.0
      %326 = vmatpush2.msra.mxu0 0.0
      %327 = vmatprep.subr.mxu0 0.0
      %328 = vmatpush2.msra.mxu0 0.0
      %329 = vmatprep.subr.mxu0 0.0
      %330 = vmatpush2.msra.mxu0 0.0
      %331 = vmatprep.subr.mxu0 0.0
      %332 = vmatpush2.msra.mxu0 0.0
      %333 = vmatprep.subr.mxu0 0.0
      %334 = vmatpush2.msra.mxu0 0.0
      %335 = vmatprep.subr.mxu0 0.0
      %336 = vmatpush2.msra.mxu0 0.0
      %337 = vmatprep.subr.mxu0 0.0
      %338 = vmatpush2.msra.mxu0 0.0
      %339 = vmatprep.subr.mxu0 0.0
      %340 = vmatpush2.msra.mxu0 0.0
      %341 = vmatprep.mubr.f32.mxu0 0.0
      %342 = vmatmul.mubr.f32.gmra.mxu0 %v272
      %v343 = vpop.f32.mrf.mxu0
      %v344 = vadd.f32 0.0, %v343
      %v345 = vpop.f32.mrf.mxu0
      %346 = vmatprep.mubr.f32.mxu0 0.0
      %347 = vmatmul.mubr.f32.gmra.mxu0 %v275
      %v348 = vpop.f32.mrf.mxu0
      %v349 = vadd.f32 0.0, %v348
      %v350 = vpop.f32.mrf.mxu0
      %351 = vdwg.mxu0
      %v352 = vld [vmem:[#allocation2] sm:$0xff]
      %v353 = vld [vmem:[#allocation2 + $0x8] sm:$0xff]
      %v354 = vadd.f32 %v352, %v344
      %v355 = vadd.f32 %v353, %v349
      %356 = vst [vmem:[#allocation9] sm:$0xff] %v354
      %357 = vst [vmem:[#allocation9 + $0x8] sm:$0xff] %v355
    $region49: #{tpu_custom_call.1} parent=1 // pred_fallthru
      _
    // Predicated region
    $region50: #{tpu_custom_call.1} parent=1 // pred_check
      _
    $region51: #{tpu_custom_call.1} parent=1 // pred_check_branch
      %359 = sbr.rel (0) target = $region53
    $region52: #{tpu_custom_call.1} parent=1 // pred_region
      %s361 = ssub.s32 256, 256
      %362 = vsyncadd [#allocation6], %s361
      %s363 = sshll.u32 [#allocation9], 4
      %s364 = int_to_ptr.vmem [resolvable:$true] %s363
      %369 = dma.vmem_to_hbm [thread:$0]  %s364, 256, %s6, [#allocation6], 128, 128, 8
    $region53: #{tpu_custom_call.1} parent=1 // pred_fallthru
      _
    // Predicated region
    $region54: #{tpu_custom_call.1} parent=1 // pred_check
      _
    $region55: #{tpu_custom_call.1} parent=1 // pred_check_branch
      %371 = sbr.rel (0) target = $region57
    $region56: #{tpu_custom_call.1} parent=1 // pred_region
      %372 = dma.done [#allocation6], 256
    $region57: #{tpu_custom_call.1} parent=1 // pred_fallthru
      _
    %373 = vsyncpa [#allocation5], 1
    %374 = vsyncpa [#allocation8], 1
    %375 = vsyncpa [#allocation6], 1

</llo_original>
